<compile_context>
chip_gen: v7x
topology: tpu7x:2x2x1
jax: 0.10.0
libtpu: 0.0.40
codegen_flags: <defaults>
</compile_context>

<pallas_src>
import jax
import jax.numpy as jnp
from jax.experimental import pallas as pl
from jax.experimental.pallas import tpu as pltpu


def attention_kernel(enc_ref, projexp_ref, bias_ref, w_ref, v_ref, g_ref, gt_ref,
                     out_ref, acc_ref):
    """Grid = (batch blocks, E2 reduction tiles). One step: Bt batch rows, one K tile.

    enc_ref    : (1, E2t, L)  encoder tile, L = Bt*S lanes ordered (batch-in-block, src)
    projexp_ref: (1, dec, L)  W_h @ hidden + b, pre-expanded to the lane layout (f32)
    bias_ref   : (1, 1, L)    additive mask bias (0 valid / -1e10 masked)
    w_ref      : (dec, E2t)   encoder half of the nn.Linear weight (K tile)
    v_ref      : (dec, 1)     v parameter as a column (f32)
    g_ref      : (L, Bt)      0/1 segment matrix (lane l belongs to batch row l // S)
    gt_ref     : (Bt, L)      its transpose
    out_ref    : (1, 1, L)    attention weights (lane-dense store)
    acc_ref    : (dec, L)     f32 accumulator scratch, carried across the K axis
    """
    k = pl.program_id(1)

    # Initialize the accumulator with the pre-expanded hidden projection (+ bias).
    @pl.when(k == 0)
    def _():
        acc_ref[...] = projexp_ref[0]

    # Encoder half of the Linear for this K tile: (dec, E2t) @ (E2t, L) on the MXU.
    acc_ref[...] += jnp.dot(w_ref[...], enc_ref[0],
                            preferred_element_type=jnp.float32)

    # Epilogue on the last K tile: tanh, v-projection, masked segmented softmax.
    @pl.when(k == pl.num_programs(1) - 1)
    def _():
        energy = jnp.tanh(acc_ref[...])                                    # (dec, L)
        # v-projection: VPU multiply + sublane (XLU) sum, not an M=1 MXU matmul.
        att = jnp.sum(v_ref[...] * energy, axis=0, keepdims=True)          # (1, L)
        att = att + bias_ref[0]                                            # masked_fill
        # Block-wide max shift (softmax invariant to per-row constants; |score| <=
        # sum|v| keeps exp well inside the f32 range; masked lanes underflow to 0).
        att = att - jnp.max(att, axis=-1, keepdims=True)
        e = jnp.exp(att)                                                   # (1, L)
        # Per-batch-row denominators via the 0/1 segment matrix, then broadcast back.
        denom = jnp.dot(e, g_ref[...], preferred_element_type=jnp.float32)   # (1, Bt)
        inv = pl.reciprocal(denom, approx=True)
        inv = inv * (2.0 - denom * inv)       # one Newton step: ~f32-exact, still EUP
        inv_l = jnp.dot(inv, gt_ref[...], preferred_element_type=jnp.float32)  # (1, L)
        out_ref[0] = e * inv_l


def _vmem_capacity_bytes():
    try:
        return int(pltpu.get_tpu_info().vmem_capacity_bytes)
    except Exception:
        return 64 * 1024 * 1024  # conservative fallback (v7x per-core VMEM)


def _step_vmem_bytes(Bt, E2t, S, dec, dot_bytes):
    """Rough per-grid-step VMEM footprint (pipelined operands double-buffered)."""
    L = Bt * S
    enc = 2 * E2t * L * dot_bytes          # encoder K tile
    w = 2 * dec * E2t * dot_bytes          # W_e K tile
    proj = 2 * dec * L * 4                 # expanded hidden projection (f32)
    seg = 2 * 2 * L * Bt * 4               # segment matrix + transpose (f32)
    misc = 2 * 3 * L * 4                   # mask bias + output (+ slack)
    acc = dec * L * 4                      # f32 accumulator scratch
    return enc + w + proj + seg + misc + acc


def _pick_block_e2(E2, L, dot_bytes, budget):
    """K tile for the E2 reduction axis (tiles must be multiples of 128: W_e last dim)."""
    if E2 % 128 != 0:
        return E2
    tiles = [t for t in range(128, E2 + 1, 128) if E2 % t == 0]
    ok = [t for t in tiles if 2 * t * L * dot_bytes <= budget // 3]
    return max(ok) if ok else min(tiles)


def _pick_block_batch(B, S, E2, dec, dot_bytes, budget):
    """Largest batch block whose per-step footprint fits the VMEM budget.

    Prefers lane-dense blocks (Bt*S a multiple of 128) and keeps >=2 grid steps
    (megacore / the two v7x TensorCores) when a still lane-dense alternative exists.
    """
    def fits(Bt):
        L = Bt * S
        E2t = _pick_block_e2(E2, L, dot_bytes, budget)
        return _step_vmem_bytes(Bt, E2t, S, dec, dot_bytes) <= budget

    divisors = [d for d in range(1, B + 1) if B % d == 0]
    fitting = [d for d in divisors if fits(d)] or [1]
    dense = [d for d in fitting if (d * S) % 128 == 0]
    cands = dense or fitting
    Bt = max(cands)
    if B // Bt == 1:
        multi = [d for d in cands if B // d >= 2 and d * S >= 256]
        if multi:
            Bt = max(multi)
    return Bt


def prepare_attention_inputs(encoder_outputs, mask, block_batch, dot_dtype=jnp.bfloat16):
    """One-time (per source sequence) layout transform of encoder outputs and mask.

    The result depends only on the encoder outputs / mask (not on the decoder hidden
    state), so a Bahdanau decoding loop should call this once and reuse the blocks for
    every decoder step via `attention_forward_prepared`.
    """
    S, B, E2 = encoder_outputs.shape
    Bt = block_batch
    assert B % Bt == 0, "block_batch must divide the batch size"
    nB = B // Bt
    L = Bt * S
    # Cast BEFORE the transpose so the layout shuffle moves dot_dtype-sized bytes.
    enc = encoder_outputs.astype(dot_dtype)
    enc = jnp.transpose(enc, (1, 2, 0))                                   # (B, E2, S)
    enc_blk = jnp.transpose(enc.reshape(nB, Bt, E2, S), (0, 2, 1, 3)).reshape(nB, E2, L)
    bias = jnp.where(mask == 0, jnp.float32(-1e10), jnp.float32(0.0))     # (B, S)
    bias_blk = bias.reshape(nB, 1, L)
    return enc_blk, bias_blk


def attention_forward_prepared(hidden, enc_blk, bias_blk, attn_w, attn_b, v, *,
                               src_len, block_e2=None, dot_dtype=jnp.bfloat16,
                               vmem_capacity=None):
    """Per-decoder-step attention on pre-laid-out encoder blocks.

    hidden: (B, dec); enc_blk/bias_blk from prepare_attention_inputs.
    Returns (B, src_len) attention weights.
    """
    nB, E2, L = enc_blk.shape
    S = src_len
    Bt = L // S
    B = nB * Bt
    dec = hidden.shape[1]
    f32 = jnp.float32
    dot_bytes = jnp.dtype(dot_dtype).itemsize

    cap = vmem_capacity if vmem_capacity is not None else _vmem_capacity_bytes()
    E2t = block_e2 if block_e2 is not None else _pick_block_e2(E2, L, dot_bytes, cap // 3)
    assert E2 % E2t == 0
    nK = E2 // E2t

    # Split the Linear weight per the torch.cat([hidden, encoder_outputs]) ordering.
    w_h = attn_w[:, :dec].astype(f32)          # (dec, dec)
    w_e = attn_w[:, dec:].astype(dot_dtype)    # (dec, E2)

    # Hidden projection + bias (position independent): one XLA matmul, expanded to the
    # kernel's (batch-in-block, src) lane layout so the kernel needs no per-batch loop.
    proj = hidden.astype(f32) @ w_h.T + attn_b.astype(f32)[None, :]        # (B, dec)
    projexp = jnp.repeat(jnp.transpose(proj.reshape(nB, Bt, dec), (0, 2, 1)),
                         S, axis=2)                                        # (nB, dec, L)

    # Constant 0/1 segment matrix (lane -> batch row within the block) + transpose.
    seg_id = jnp.arange(L, dtype=jnp.int32) // S
    g_mat = (seg_id[:, None] == jnp.arange(Bt, dtype=jnp.int32)[None, :]).astype(f32)
    gt_mat = g_mat.T

    v_col = v.reshape(dec, 1).astype(f32)

    est = _step_vmem_bytes(Bt, E2t, S, dec, dot_bytes)
    vmem_limit = int(min(max(cap - (8 << 20), 32 << 20),
                         max(32 << 20, cap // 2, est + (16 << 20))))

    out = pl.pallas_call(
        attention_kernel,
        out_shape=jax.ShapeDtypeStruct((nB, 1, L), f32),
        grid_spec=pltpu.PrefetchScalarGridSpec(
            num_scalar_prefetch=0,
            grid=(nB, nK),
            in_specs=[
                pl.BlockSpec((1, E2t, L), lambda g, k: (g, k, 0)),   # encoder tile
                pl.BlockSpec((1, dec, L), lambda g, k: (g, 0, 0)),   # expanded hidden proj
                pl.BlockSpec((1, 1, L), lambda g, k: (g, 0, 0)),     # additive mask bias
                pl.BlockSpec((dec, E2t), lambda g, k: (0, k)),       # W_e K tile
                pl.BlockSpec((dec, 1), lambda g, k: (0, 0)),         # v (resident)
                pl.BlockSpec((L, Bt), lambda g, k: (0, 0)),          # segment matrix
                pl.BlockSpec((Bt, L), lambda g, k: (0, 0)),          # segment matrix^T
            ],
            out_specs=pl.BlockSpec((1, 1, L), lambda g, k: (g, 0, 0)),
            scratch_shapes=[pltpu.VMEM((dec, L), jnp.float32)],
        ),
        compiler_params=pltpu.CompilerParams(
            dimension_semantics=("parallel", "arbitrary"),
            vmem_limit_bytes=vmem_limit,
        ),
    )(enc_blk, projexp, bias_blk, w_e, v_col, g_mat, gt_mat)

    # Lane order inside a block is (batch-in-block, src position) -> plain reshape.
    return out.reshape(B, S)


def attention_forward(hidden, encoder_outputs, mask, attn_w, attn_b, v, *,
                      block_batch=None, block_e2=None, dot_dtype=jnp.bfloat16,
                      vmem_budget_bytes=None):
    """hidden: (B, dec), encoder_outputs: (S, B, 2*enc), mask: (B, S) -> (B, S)."""
    S, B, E2 = encoder_outputs.shape
    dec = hidden.shape[1]
    dot_bytes = jnp.dtype(dot_dtype).itemsize

    cap = _vmem_capacity_bytes()
    budget = vmem_budget_bytes if vmem_budget_bytes is not None else cap // 3
    Bt = (block_batch if block_batch is not None
          else _pick_block_batch(B, S, E2, dec, dot_bytes, budget))
    assert B % Bt == 0, "block_batch must divide the batch size"

    enc_blk, bias_blk = prepare_attention_inputs(encoder_outputs, mask, Bt, dot_dtype)
    return attention_forward_prepared(hidden, enc_blk, bias_blk, attn_w, attn_b, v,
                                      src_len=S, block_e2=block_e2,
                                      dot_dtype=dot_dtype, vmem_capacity=cap)


def attention_reference(hidden, encoder_outputs, mask, attn_w, attn_b, v):
    """Plain-JAX transcription of the PyTorch forward, for verification."""
    S, B, _ = encoder_outputs.shape
    hid = jnp.repeat(hidden[:, None, :], S, axis=1)            # (B, S, dec)
    enc = jnp.transpose(encoder_outputs, (1, 0, 2))            # (B, S, 2*enc)
    x = jnp.concatenate([hid, enc], axis=2)                    # (B, S, in)
    energy = jnp.tanh(x @ attn_w.T + attn_b)                   # (B, S, dec)
    att = jnp.einsum("d,bsd->bs", v, energy)                   # (B, S)
    att = jnp.where(mask == 0, -1e10, att)
    return jax.nn.softmax(att, axis=1)


if __name__ == "__main__":
    key = jax.random.PRNGKey(0)
    (k_h, k_e, k_w, k_b, k_v,
     k_h2, k_e2, k_w2, k_b2, k_v2) = jax.random.split(key, 10)

    # --- Test 1: module-sized small shapes (enc_hid=16, dec_hid=32, B=2, S=8). ------
    enc_hid_dim, dec_hid_dim, batch, src_len = 16, 32, 2, 8
    in_dim = enc_hid_dim * 2 + dec_hid_dim

    bound = 1.0 / jnp.sqrt(jnp.float32(in_dim))
    attn_w = jax.random.uniform(k_w, (dec_hid_dim, in_dim), jnp.float32, -bound, bound)
    attn_b = jax.random.uniform(k_b, (dec_hid_dim,), jnp.float32, -bound, bound)
    v = jax.random.uniform(k_v, (dec_hid_dim,), jnp.float32, 0.0, 1.0)

    hidden = jax.random.normal(k_h, (batch, dec_hid_dim), jnp.float32)
    encoder_outputs = jax.random.normal(
        k_e, (src_len, batch, enc_hid_dim * 2), jnp.float32)
    lengths = jnp.array([src_len, 5], dtype=jnp.int32)
    mask = (jnp.arange(src_len)[None, :] < lengths[:, None]).astype(jnp.int32)  # (B, S)

    ref = attention_reference(hidden, encoder_outputs, mask, attn_w, attn_b, v)

    # f32 MXU inputs: tight check (approx-reciprocal + Newton keeps it ~f32 exact).
    out_f32 = attention_forward(hidden, encoder_outputs, mask, attn_w, attn_b, v,
                                dot_dtype=jnp.float32)
    out_f32 = jax.block_until_ready(out_f32)
    assert out_f32.shape == (batch, src_len)
    assert jnp.allclose(out_f32, ref, rtol=1e-4, atol=1e-4), (out_f32, ref)
    assert jnp.allclose(jnp.sum(out_f32, axis=1), 1.0, atol=1e-4)

    # Default bf16 MXU inputs (fast path on every generation): looser check.
    out_bf16 = attention_forward(hidden, encoder_outputs, mask, attn_w, attn_b, v)
    out_bf16 = jax.block_until_ready(out_bf16)
    assert out_bf16.shape == (batch, src_len)
    assert jnp.allclose(out_bf16, ref, atol=5e-2), (out_bf16, ref)
    assert jnp.allclose(jnp.sum(out_bf16, axis=1), 1.0, atol=1e-3)

    # --- Test 2: exercise multi-block grid + E2 reduction axis (nB=4, nK=2) and the
    # hoisted prepare path used by decoding loops. -----------------------------------
    enc_hid2, dec2, batch2, src_len2 = 128, 64, 8, 16
    in_dim2 = enc_hid2 * 2 + dec2
    bound2 = 1.0 / jnp.sqrt(jnp.float32(in_dim2))
    attn_w2 = jax.random.uniform(k_w2, (dec2, in_dim2), jnp.float32, -bound2, bound2)
    attn_b2 = jax.random.uniform(k_b2, (dec2,), jnp.float32, -bound2, bound2)
    v2 = jax.random.uniform(k_v2, (dec2,), jnp.float32, 0.0, 1.0)
    hidden2 = jax.random.normal(k_h2, (batch2, dec2), jnp.float32)
    enc2 = jax.random.normal(k_e2, (src_len2, batch2, enc_hid2 * 2), jnp.float32)
    lengths2 = jnp.arange(batch2, dtype=jnp.int32) % src_len2 + 1
    mask2 = (jnp.arange(src_len2)[None, :] < lengths2[:, None]).astype(jnp.int32)

    ref2 = attention_reference(hidden2, enc2, mask2, attn_w2, attn_b2, v2)
    enc_blk2, bias_blk2 = prepare_attention_inputs(enc2, mask2, block_batch=2,
                                                   dot_dtype=jnp.float32)
    out2 = attention_forward_prepared(hidden2, enc_blk2, bias_blk2,
                                      attn_w2, attn_b2, v2,
                                      src_len=src_len2, block_e2=128,
                                      dot_dtype=jnp.float32)
    out2 = jax.block_until_ready(out2)
    assert out2.shape == (batch2, src_len2)
    assert jnp.allclose(out2, ref2, rtol=1e-4, atol=1e-4), (out2, ref2)
    assert jnp.allclose(jnp.sum(out2, axis=1), 1.0, atol=1e-4)

    print("KERNEL_OK")
</pallas_src>

<mosaic_0001>
module attributes {stable_mosaic.version = 11 : i64} {
  func.func @attention_kernel(%arg0: i32, %arg1: i32, %arg2: memref<1x32x16xf32, #tpu.memory_space<vmem>>, %arg3: memref<1x32x16xf32, #tpu.memory_space<vmem>>, %arg4: memref<1x1x16xf32, #tpu.memory_space<vmem>>, %arg5: memref<32x32xf32, #tpu.memory_space<vmem>>, %arg6: memref<32x1xf32, #tpu.memory_space<vmem>>, %arg7: memref<16x2xf32, #tpu.memory_space<vmem>>, %arg8: memref<2x16xf32, #tpu.memory_space<vmem>>, %arg9: memref<1x1x16xf32, #tpu.memory_space<vmem>>, %arg10: memref<32x16xf32, #tpu.memory_space<vmem>>) attributes {dimension_semantics = [#tpu.dimension_semantics<parallel>, #tpu.dimension_semantics<arbitrary>], iteration_bounds = array<i64: 1, 1>, scalar_prefetch = 0 : i64, scratch_operands = 1 : i64, tpu.core_type = #tpu.core_type<tc>, window_params = [{transform_indices = @transform_0, window_bounds = array<i64: 1, 32, 16>}, {transform_indices = @transform_1, window_bounds = array<i64: 1, 32, 16>}, {transform_indices = @transform_2, window_bounds = array<i64: 1, 1, 16>}, {transform_indices = @transform_3, window_bounds = array<i64: 32, 32>}, {pipeline_mode = #tpu.pipeline_mode<synchronous>, transform_indices = @transform_4, window_bounds = array<i64: 32, 1>}, {pipeline_mode = #tpu.pipeline_mode<synchronous>, transform_indices = @transform_5, window_bounds = array<i64: 16, 2>}, {pipeline_mode = #tpu.pipeline_mode<synchronous>, transform_indices = @transform_6, window_bounds = array<i64: 2, 16>}, {transform_indices = @transform_7, window_bounds = array<i64: 1, 1, 16>}]} {
    %c0_i32 = arith.constant 0 : i32
    %0 = arith.cmpi eq, %arg1, %c0_i32 : i32
    %1 = arith.extui %0 : i1 to i32
    %c0_i32_0 = arith.constant 0 : i32
    %2 = arith.cmpi ne, %1, %c0_i32_0 : i32
    scf.if %2 {
      %c0_11 = arith.constant 0 : index
      %c0_12 = arith.constant 0 : index
      %c0_13 = arith.constant 0 : index
      %13 = vector.load %arg3[%c0_11, %c0_12, %c0_13] : memref<1x32x16xf32, #tpu.memory_space<vmem>>, vector<1x32x16xf32>
      %14 = vector.shape_cast %13 : vector<1x32x16xf32> to vector<32x16xf32>
      %c0_14 = arith.constant 0 : index
      %c0_15 = arith.constant 0 : index
      %15 = vector.load %arg10[%c0_14, %c0_15] : memref<32x16xf32, #tpu.memory_space<vmem>>, vector<32x16xf32>
      tpu.vector_store %arg10[%c0_14, %c0_15], %14 {strides = array<i32>} : memref<32x16xf32, #tpu.memory_space<vmem>>, vector<32x16xf32>,
    } else {
    }
    %c0 = arith.constant 0 : index
    %c0_1 = arith.constant 0 : index
    %3 = vector.load %arg10[%c0, %c0_1] : memref<32x16xf32, #tpu.memory_space<vmem>>, vector<32x16xf32>
    %c0_2 = arith.constant 0 : index
    %c0_3 = arith.constant 0 : index
    %4 = vector.load %arg5[%c0_2, %c0_3] : memref<32x32xf32, #tpu.memory_space<vmem>>, vector<32x32xf32>
    %c0_4 = arith.constant 0 : index
    %c0_5 = arith.constant 0 : index
    %c0_6 = arith.constant 0 : index
    %5 = vector.load %arg2[%c0_4, %c0_5, %c0_6] : memref<1x32x16xf32, #tpu.memory_space<vmem>>, vector<1x32x16xf32>
    %6 = vector.shape_cast %5 : vector<1x32x16xf32> to vector<32x16xf32>
    %cst = arith.constant dense<0.000000e+00> : vector<32x16xf32>
    %7 = tpu.matmul %4, %6, %cst {dimension_numbers = #tpu.dot_dimension_numbers<[1], [0], [0], [1], [0, 0, 1, 1], [], []>} : vector<32x32xf32>, vector<32x16xf32>, vector<32x16xf32> -> vector<32x16xf32>
    %8 = arith.addf %3, %7 : vector<32x16xf32>
    %c0_7 = arith.constant 0 : index
    %c0_8 = arith.constant 0 : index
    %9 = vector.load %arg10[%c0_7, %c0_8] : memref<32x16xf32, #tpu.memory_space<vmem>>, vector<32x16xf32>
    tpu.vector_store %arg10[%c0_7, %c0_8], %8 {strides = array<i32>} : memref<32x16xf32, #tpu.memory_space<vmem>>, vector<32x16xf32>,
    %c0_i32_9 = arith.constant 0 : i32
    %10 = arith.cmpi eq, %arg1, %c0_i32_9 : i32
    %11 = arith.extui %10 : i1 to i32
    %c0_i32_10 = arith.constant 0 : i32
    %12 = arith.cmpi ne, %11, %c0_i32_10 : i32
    scf.if %12 {
      %c0_11 = arith.constant 0 : index
      %c0_12 = arith.constant 0 : index
      %13 = vector.load %arg10[%c0_11, %c0_12] : memref<32x16xf32, #tpu.memory_space<vmem>>, vector<32x16xf32>
      %14 = math.tanh %13 : vector<32x16xf32>
      %c0_13 = arith.constant 0 : index
      %c0_14 = arith.constant 0 : index
      %15 = vector.load %arg6[%c0_13, %c0_14] : memref<32x1xf32, #tpu.memory_space<vmem>>, vector<32x1xf32>
      %16 = vector.broadcast %15 : vector<32x1xf32> to vector<32x16xf32>
      %17 = arith.mulf %16, %14 : vector<32x16xf32>
      %cst_15 = arith.constant dense<0.000000e+00> : vector<16xf32>
      %18 = vector.multi_reduction <add>, %17, %cst_15 [0] : vector<32x16xf32> to vector<16xf32>
      %19 = vector.shape_cast %18 : vector<16xf32> to vector<1x16xf32>
      %c0_16 = arith.constant 0 : index
      %c0_17 = arith.constant 0 : index
      %c0_18 = arith.constant 0 : index
      %20 = vector.load %arg4[%c0_16, %c0_17, %c0_18] : memref<1x1x16xf32, #tpu.memory_space<vmem>>, vector<1x1x16xf32>
      %21 = vector.shape_cast %20 : vector<1x1x16xf32> to vector<1x16xf32>
      %22 = arith.addf %19, %21 : vector<1x16xf32>
      %cst_19 = arith.constant dense<0xFF800000> : vector<1xf32>
      %23 = vector.multi_reduction <maximumf>, %22, %cst_19 [1] : vector<1x16xf32> to vector<1xf32>
      %24 = vector.shape_cast %23 : vector<1xf32> to vector<1x1xf32>
      %25 = vector.broadcast %24 : vector<1x1xf32> to vector<1x16xf32>
      %26 = arith.subf %22, %25 : vector<1x16xf32>
      %27 = math.exp %26 : vector<1x16xf32>
      %c0_20 = arith.constant 0 : index
      %c0_21 = arith.constant 0 : index
      %28 = vector.load %arg7[%c0_20, %c0_21] : memref<16x2xf32, #tpu.memory_space<vmem>>, vector<16x2xf32>
      %cst_22 = arith.constant dense<0.000000e+00> : vector<1x2xf32>
      %29 = tpu.matmul %27, %28, %cst_22 {dimension_numbers = #tpu.dot_dimension_numbers<[1], [0], [0], [1], [0, 0, 1, 1], [], []>} : vector<1x16xf32>, vector<16x2xf32>, vector<1x2xf32> -> vector<1x2xf32>
      %30 = tpu.reciprocal %29 {approx = true} : vector<1x2xf32> -> vector<1x2xf32>
      %31 = arith.mulf %29, %30 : vector<1x2xf32>
      %cst_23 = arith.constant 2.000000e+00 : f32
      %32 = vector.broadcast %cst_23 : f32 to vector<1x2xf32>
      %33 = arith.subf %32, %31 : vector<1x2xf32>
      %34 = arith.mulf %30, %33 : vector<1x2xf32>
      %c0_24 = arith.constant 0 : index
      %c0_25 = arith.constant 0 : index
      %35 = vector.load %arg8[%c0_24, %c0_25] : memref<2x16xf32, #tpu.memory_space<vmem>>, vector<2x16xf32>
      %cst_26 = arith.constant dense<0.000000e+00> : vector<1x16xf32>
      %36 = tpu.matmul %34, %35, %cst_26 {dimension_numbers = #tpu.dot_dimension_numbers<[1], [0], [0], [1], [0, 0, 1, 1], [], []>} : vector<1x2xf32>, vector<2x16xf32>, vector<1x16xf32> -> vector<1x16xf32>
      %37 = arith.mulf %27, %36 : vector<1x16xf32>
      %c0_27 = arith.constant 0 : index
      %c0_28 = arith.constant 0 : index
      %c0_29 = arith.constant 0 : index
      %38 = vector.load %arg9[%c0_27, %c0_28, %c0_29] : memref<1x1x16xf32, #tpu.memory_space<vmem>>, vector<1x1x16xf32>
      %39 = vector.shape_cast %38 : vector<1x1x16xf32> to vector<1x16xf32>
      %40 = vector.shape_cast %37 : vector<1x16xf32> to vector<1x1x16xf32>
      tpu.vector_store %arg9[%c0_27, %c0_28, %c0_29], %40 {strides = array<i32>} : memref<1x1x16xf32, #tpu.memory_space<vmem>>, vector<1x1x16xf32>,
    } else {
    }
    return
  }
  func.func @transform_0(%arg0: i32, %arg1: i32) -> (i32, i32, i32) {
    %c0_i32 = arith.constant 0 : i32
    %c0_i32_0 = arith.constant 0 : i32
    return %arg0, %arg1, %c0_i32 : i32, i32, i32
  }
  func.func @transform_1(%arg0: i32, %arg1: i32) -> (i32, i32, i32) {
    %c0_i32 = arith.constant 0 : i32
    %c0_i32_0 = arith.constant 0 : i32
    %c0_i32_1 = arith.constant 0 : i32
    return %arg0, %c0_i32, %c0_i32_0 : i32, i32, i32
  }
  func.func @transform_2(%arg0: i32, %arg1: i32) -> (i32, i32, i32) {
    %c0_i32 = arith.constant 0 : i32
    %c0_i32_0 = arith.constant 0 : i32
    %c0_i32_1 = arith.constant 0 : i32
    return %arg0, %c0_i32, %c0_i32_0 : i32, i32, i32
  }
  func.func @transform_3(%arg0: i32, %arg1: i32) -> (i32, i32) {
    %c0_i32 = arith.constant 0 : i32
    %c0_i32_0 = arith.constant 0 : i32
    return %c0_i32, %arg1 : i32, i32
  }
  func.func @transform_4(%arg0: i32, %arg1: i32) -> (i32, i32) {
    %c0_i32 = arith.constant 0 : i32
    %c0_i32_0 = arith.constant 0 : i32
    %c0_i32_1 = arith.constant 0 : i32
    return %c0_i32, %c0_i32_0 : i32, i32
  }
  func.func @transform_5(%arg0: i32, %arg1: i32) -> (i32, i32) {
    %c0_i32 = arith.constant 0 : i32
    %c0_i32_0 = arith.constant 0 : i32
    %c0_i32_1 = arith.constant 0 : i32
    return %c0_i32, %c0_i32_0 : i32, i32
  }
  func.func @transform_6(%arg0: i32, %arg1: i32) -> (i32, i32) {
    %c0_i32 = arith.constant 0 : i32
    %c0_i32_0 = arith.constant 0 : i32
    %c0_i32_1 = arith.constant 0 : i32
    return %c0_i32, %c0_i32_0 : i32, i32
  }
  func.func @transform_7(%arg0: i32, %arg1: i32) -> (i32, i32, i32) {
    %c0_i32 = arith.constant 0 : i32
    %c0_i32_0 = arith.constant 0 : i32
    %c0_i32_1 = arith.constant 0 : i32
    return %arg0, %c0_i32, %c0_i32_0 : i32, i32, i32
  }
}

</mosaic_0001>

<llo_original>
// kernel: tpu_custom_call.1
$region0: #{tpu_custom_call.1}
  #allocation0 [shape = 'u32[]', space=smem, size = 0x4, offset = 0x4, fixed_abs, tag = 'smem constant byte address 0x4 - core index']
  #allocation1 [shape = 'u32[144,128]{1,0:T(1,128)}', space=vmem, size = 0x12000, scoped, tag = 'internal scratch']
  #allocation2 [shape = 'f32[32,16]{1,0:T(8,128)}', space=vmem, size = 0x4000, scoped, tag = 'scratch operand']
  %s0 = inlined_call_operand.vmem [shape: f32[1,32,16], index: 0, kind: input, shape index: {}]
  %s1 = inlined_call_operand.vmem [shape: f32[1,32,16], index: 1, kind: input, shape index: {}]
  %s2 = inlined_call_operand.vmem [shape: f32[1,1,16], index: 2, kind: input, shape index: {}]
  %s3 = inlined_call_operand.vmem [shape: f32[32,32], index: 3, kind: input, shape index: {}]
  %s4 = inlined_call_operand.vmem [shape: f32[32,1], index: 4, kind: input, shape index: {}]
  %s5 = inlined_call_operand.vmem [shape: f32[16,2], index: 5, kind: input, shape index: {}]
  %s6 = inlined_call_operand.vmem [shape: f32[2,16], index: 6, kind: input, shape index: {}]
  %s7 = inlined_call_operand.hbm [shape: f32[1,1,16], index: 7, kind: output, shape index: {}]
  %s8 = sld [smem:[#allocation0]]
  $region46: #{tpu_custom_call.1} parent=0
    _
  %s10 = ssub.s32 1, %s8
  %s11 = scalar_select 0, %s10, %s8
  $region1: #{tpu_custom_call.1} parent=0
    #allocation3 [shape = 'u8[512]{0}', space=vmem, size = 0x400, scoped, tag = 'output window, operand 0, single buffered']
    #allocation4 [shape = 's32[1]{0}', space=sflag, size = 0x4, scoped, tag = 'scoped memory for tpu_custom_call.1']
    %12 = vsyncpa [#allocation4], 0
    // Predicated region
    $region2: #{tpu_custom_call.1} parent=1 // pred_check
      _
    $region3: #{tpu_custom_call.1} parent=1 // pred_check_branch
      %14 = sbr.rel (0) target = $region5
    $region4: #{tpu_custom_call.1} parent=1 // pred_region
      _
    $region5: #{tpu_custom_call.1} parent=1 // pred_fallthru
      _
    // Predicated region
    $region6: #{tpu_custom_call.1} parent=1 // pred_check
      _
    $region7: #{tpu_custom_call.1} parent=1 // pred_check_branch
      %16 = sbr.rel (0) target = $region9
    $region8: #{tpu_custom_call.1} parent=1 // pred_region
      _
    $region9: #{tpu_custom_call.1} parent=1 // pred_fallthru
      _
    // Predicated region
    $region10: #{tpu_custom_call.1} parent=1 // pred_check
      _
    $region11: #{tpu_custom_call.1} parent=1 // pred_check_branch
      %18 = sbr.rel (0) target = $region13
    $region12: #{tpu_custom_call.1} parent=1 // pred_region
      _
    $region13: #{tpu_custom_call.1} parent=1 // pred_fallthru
      _
    // Predicated region
    $region14: #{tpu_custom_call.1} parent=1 // pred_check
      _
    $region15: #{tpu_custom_call.1} parent=1 // pred_check_branch
      %20 = sbr.rel (0) target = $region17
    $region16: #{tpu_custom_call.1} parent=1 // pred_region
      _
    $region17: #{tpu_custom_call.1} parent=1 // pred_fallthru
      _
    // Predicated region
    $region18: #{tpu_custom_call.1} parent=1 // pred_check
      _
    $region19: #{tpu_custom_call.1} parent=1 // pred_check_branch
      %22 = sbr.rel (0) target = $region21
    $region20: #{tpu_custom_call.1} parent=1 // pred_region
      _
    $region21: #{tpu_custom_call.1} parent=1 // pred_fallthru
      _
    // Predicated region
    $region22: #{tpu_custom_call.1} parent=1 // pred_check
      _
    $region23: #{tpu_custom_call.1} parent=1 // pred_check_branch
      %24 = sbr.rel (0) target = $region25
    $region24: #{tpu_custom_call.1} parent=1 // pred_region
      _
    $region25: #{tpu_custom_call.1} parent=1 // pred_fallthru
      _
    // Predicated region
    $region26: #{tpu_custom_call.1} parent=1 // pred_check
      _
    $region27: #{tpu_custom_call.1} parent=1 // pred_check_branch
      %26 = sbr.rel (0) target = $region29
    $region28: #{tpu_custom_call.1} parent=1 // pred_region
      _
    $region29: #{tpu_custom_call.1} parent=1 // pred_fallthru
      _
    %p27 = scmp.eq.s32.totalorder 0, 0
    // Predicated region
    $region30: #{tpu_custom_call.1} parent=1 // pred_check
      %p28 = pneg %p27
    $region31: #{tpu_custom_call.1} parent=1 // pred_check_branch
      %30 = sbr.rel (%p28) target = $region33
    $region32: #{tpu_custom_call.1} parent=1 // pred_region
      %v31 = vld [vmem:[%s1] sm:$0xff]
      %v32 = vld [vmem:[%s1 + $0x8] sm:$0xff]
      %v33 = vld [vmem:[%s1 + $0x10] sm:$0xff]
      %v34 = vld [vmem:[%s1 + $0x18] sm:$0xff]
      %vm35 = vcmask 130048
      %36 = vst.msk [vmem:[#allocation2] sm:$0xff] %vm35, %v31
      %37 = vst.msk [vmem:[#allocation2 + $0x8] sm:$0xff] %vm35, %v32
      %38 = vst.msk [vmem:[#allocation2 + $0x10] sm:$0xff] %vm35, %v33
      %39 = vst.msk [vmem:[#allocation2 + $0x18] sm:$0xff] %vm35, %v34
    $region33: #{tpu_custom_call.1} parent=1 // pred_fallthru
      _
    %v40 = vld [vmem:[#allocation2] sm:$0xff]
    %v41 = vld [vmem:[#allocation2 + $0x8] sm:$0xff]
    %v42 = vld [vmem:[#allocation2 + $0x10] sm:$0xff]
    %v43 = vld [vmem:[#allocation2 + $0x18] sm:$0xff]
    %v44 = vld [vmem:[%s3] sm:$0xff]
    %v45 = vld [vmem:[%s3 + $0x8] sm:$0xff]
    %v46 = vld [vmem:[%s3 + $0x10] sm:$0xff]
    %v47 = vld [vmem:[%s3 + $0x18] sm:$0xff]
    %v48 = vld [vmem:[%s0] sm:$0xff]
    %v49 = vld [vmem:[%s0 + $0x8] sm:$0xff]
    %v50 = vld [vmem:[%s0 + $0x10] sm:$0xff]
    %v51 = vld [vmem:[%s0 + $0x18] sm:$0xff]
    %vm52 = vcmask 261120
    %v54 = vsel %vm52, %v44, 0
    %v57 = vsel %vm52, %v45, 0
    %v60 = vsel %vm52, %v46, 0
    %v63 = vsel %vm52, %v47, 0
    %65 = vmatprep.subr.mxu0 0.0
    %66 = vmatpush1.msra.mxu0 %v48
    %67 = vmatprep.subr.mxu0 0.0
    %68 = vmatpush1.msra.mxu0 %v49
    %69 = vmatprep.subr.mxu0 0.0
    %70 = vmatpush1.msra.mxu0 %v50
    %71 = vmatprep.subr.mxu0 0.0
    %72 = vmatpush1.msra.mxu0 %v51
    %73 = vmatprep.subr.mxu0 0.0
    %74 = vmatpush1.msra.mxu0 0.0
    %75 = vmatprep.subr.mxu0 0.0
    %76 = vmatpush1.msra.mxu0 0.0
    %77 = vmatprep.subr.mxu0 0.0
    %78 = vmatpush1.msra.mxu0 0.0
    %79 = vmatprep.subr.mxu0 0.0
    %80 = vmatpush1.msra.mxu0 0.0
    %81 = vmatprep.subr.mxu0 0.0
    %82 = vmatpush1.msra.mxu0 0.0
    %83 = vmatprep.subr.mxu0 0.0
    %84 = vmatpush1.msra.mxu0 0.0
    %85 = vmatprep.subr.mxu0 0.0
    %86 = vmatpush1.msra.mxu0 0.0
    %87 = vmatprep.subr.mxu0 0.0
    %88 = vmatpush1.msra.mxu0 0.0
    %89 = vmatprep.subr.mxu0 0.0
    %90 = vmatpush1.msra.mxu0 0.0
    %91 = vmatprep.subr.mxu0 0.0
    %92 = vmatpush1.msra.mxu0 0.0
    %93 = vmatprep.subr.mxu0 0.0
    %94 = vmatpush1.msra.mxu0 0.0
    %95 = vmatprep.subr.mxu0 0.0
    %96 = vmatpush1.msra.mxu0 0.0
    %97 = vmatprep.subr.mxu0 0.0
    %98 = vmatpush1.msra.mxu0 0.0
    %99 = vmatprep.subr.mxu0 0.0
    %100 = vmatpush1.msra.mxu0 0.0
    %101 = vmatprep.subr.mxu0 0.0
    %102 = vmatpush1.msra.mxu0 0.0
    %103 = vmatprep.subr.mxu0 0.0
    %104 = vmatpush1.msra.mxu0 0.0
    %105 = vmatprep.subr.mxu0 0.0
    %106 = vmatpush1.msra.mxu0 0.0
    %107 = vmatprep.subr.mxu0 0.0
    %108 = vmatpush1.msra.mxu0 0.0
    %109 = vmatprep.subr.mxu0 0.0
    %110 = vmatpush1.msra.mxu0 0.0
    %111 = vmatprep.subr.mxu0 0.0
    %112 = vmatpush1.msra.mxu0 0.0
    %113 = vmatprep.subr.mxu0 0.0
    %114 = vmatpush1.msra.mxu0 0.0
    %115 = vmatprep.subr.mxu0 0.0
    %116 = vmatpush1.msra.mxu0 0.0
    %117 = vmatprep.subr.mxu0 0.0
    %118 = vmatpush1.msra.mxu0 0.0
    %119 = vmatprep.subr.mxu0 0.0
    %120 = vmatpush1.msra.mxu0 0.0
    %121 = vmatprep.subr.mxu0 0.0
    %122 = vmatpush1.msra.mxu0 0.0
    %123 = vmatprep.subr.mxu0 0.0
    %124 = vmatpush1.msra.mxu0 0.0
    %125 = vmatprep.subr.mxu0 0.0
    %126 = vmatpush1.msra.mxu0 0.0
    %127 = vmatprep.subr.mxu0 0.0
    %128 = vmatpush1.msra.mxu0 0.0
    %129 = vmatprep.mubr.f32.mxu0 0.0
    %130 = vmatmul.mubr.f32.gmra.mrb[0].mxu0 %v54
    %v131 = vpop.f32.mrb[0].mxu0
    %v132 = vadd.f32 0.0, %v131
    %v133 = vpop.f32.mrb[0].mxu0
    %134 = vmatprep.mubr.f32.mxu0 0.0
    %135 = vmatmul.mubr.f32.gmra.mrb[0].mxu0 %v57
    %v136 = vpop.f32.mrb[0].mxu0
    %v137 = vadd.f32 0.0, %v136
    %v138 = vpop.f32.mrb[0].mxu0
    %139 = vmatprep.mubr.f32.mxu0 0.0
    %140 = vmatmul.mubr.f32.gmra.mrb[0].mxu0 %v60
    %v141 = vpop.f32.mrb[0].mxu0
    %v142 = vadd.f32 0.0, %v141
    %v143 = vpop.f32.mrb[0].mxu0
    %144 = vmatprep.mubr.f32.mxu0 0.0
    %145 = vmatmul.mubr.f32.gmra.mrb[0].mxu0 %v63
    %v146 = vpop.f32.mrb[0].mxu0
    %v147 = vadd.f32 0.0, %v146
    %v148 = vpop.f32.mrb[0].mxu0
    %149 = vdwg.mxu0
    %v150 = vadd.f32 %v40, %v132
    %v151 = vadd.f32 %v41, %v137
    %v152 = vadd.f32 %v42, %v142
    %v153 = vadd.f32 %v43, %v147
    %vm154 = vcmask 130048
    %155 = vst.msk [vmem:[#allocation2] sm:$0xff] %vm154, %v150
    %156 = vst.msk [vmem:[#allocation2 + $0x8] sm:$0xff] %vm154, %v151
    %157 = vst.msk [vmem:[#allocation2 + $0x10] sm:$0xff] %vm154, %v152
    %158 = vst.msk [vmem:[#allocation2 + $0x18] sm:$0xff] %vm154, %v153
    // Predicated region
    $region34: #{tpu_custom_call.1} parent=1 // pred_check
      %p159 = pneg %p27
    $region35: #{tpu_custom_call.1} parent=1 // pred_check_branch
      %161 = sbr.rel (%p159) target = $region37
    $region36: #{tpu_custom_call.1} parent=1 // pred_region
      %v162 = vld [vmem:[#allocation2] sm:$0xff]
      %v163 = vld [vmem:[#allocation2 + $0x8] sm:$0xff]
      %v164 = vld [vmem:[#allocation2 + $0x10] sm:$0xff]
      %v165 = vld [vmem:[#allocation2 + $0x18] sm:$0xff]
      %v166 = vtanh.pop %v162
      %v167 = vtanh.pop %v163
      %v168 = vtanh.pop %v164
      %v169 = vtanh.pop %v165
      %v170 = vld [vmem:[%s4] sm:$0xff]
      %v171 = vld [vmem:[%s4 + $0x8] sm:$0xff]
      %v172 = vld [vmem:[%s4 + $0x10] sm:$0xff]
      %v173 = vld [vmem:[%s4 + $0x18] sm:$0xff]
      %175 = vset.pattern.permute.xlu0 0
      %176 = vperm.xlu0 %175, %v170
      %v177 = vpop.permute.xlu0 %176
      %180 = vset.pattern.permute.xlu0 0
      %181 = vperm.xlu0 %180, %v171
      %v182 = vpop.permute.xlu0 %181
      %185 = vset.pattern.permute.xlu0 0
      %186 = vperm.xlu0 %185, %v172
      %v187 = vpop.permute.xlu0 %186
      %190 = vset.pattern.permute.xlu0 0
      %191 = vperm.xlu0 %190, %v173
      %v192 = vpop.permute.xlu0 %191
      %v194 = vmul.f32 %v177, %v166
      %v195 = vmul.f32 %v182, %v167
      %v196 = vmul.f32 %v187, %v168
      %v197 = vmul.f32 %v192, %v169
      %v198 = vsel %vm154, %v194, 0.0
      %v199 = vsel %vm154, %v195, 0.0
      %v200 = vadd.f32 %v198, %v199
      %v201 = vsel %vm154, %v196, 0.0
      %v202 = vadd.f32 %v200, %v201
      %v203 = vsel %vm154, %v197, 0.0
      %v204 = vadd.f32 %v202, %v203
      %v205 = vrot.slane %v204, 4
      %v206 = vadd.f32 %v204, %v205
      %v207 = vrot.slane %v206, 2
      %v208 = vadd.f32 %v206, %v207
      %v209 = vrot.slane %v208, 1
      %v210 = vadd.f32 %v208, %v209
      %v211 = vld [vmem:[%s2] sm:$0x1]
      %v212 = vadd.f32 %v210, %v211
      %vm213 = vcmask 122880
      %v214 = vsel %vm213, %v212, -inf
      %215 = vmax.xlane.f32.xlu0 %v214
      %v216 = vpop.xlane.xlu0 %215
      %v217 = vsub.f32 %v212, %v216
      %v218 = vmul.f32 %v217, 1.442695
      %v219 = vpow.pop %v218
      %v220 = vld [vmem:[%s5] sm:$0xff]
      %v221 = vld [vmem:[%s5 + $0x8] sm:$0xff]
      %v223 = vsel %vm154, %v219, 0
      %225 = vmatprep.subr.mxu0 0.0
      %226 = vmatpush1.msra.mxu0 %v220
      %227 = vmatprep.subr.mxu0 0.0
      %228 = vmatpush1.msra.mxu0 %v221
      %229 = vmatprep.subr.mxu0 0.0
      %230 = vmatpush1.msra.mxu0 0.0
      %231 = vmatprep.subr.mxu0 0.0
      %232 = vmatpush1.msra.mxu0 0.0
      %233 = vmatprep.subr.mxu0 0.0
      %234 = vmatpush1.msra.mxu0 0.0
      %235 = vmatprep.subr.mxu0 0.0
      %236 = vmatpush1.msra.mxu0 0.0
      %237 = vmatprep.subr.mxu0 0.0
      %238 = vmatpush1.msra.mxu0 0.0
      %239 = vmatprep.subr.mxu0 0.0
      %240 = vmatpush1.msra.mxu0 0.0
      %241 = vmatprep.subr.mxu0 0.0
      %242 = vmatpush1.msra.mxu0 0.0
      %243 = vmatprep.subr.mxu0 0.0
      %244 = vmatpush1.msra.mxu0 0.0
      %245 = vmatprep.subr.mxu0 0.0
      %246 = vmatpush1.msra.mxu0 0.0
      %247 = vmatprep.subr.mxu0 0.0
      %248 = vmatpush1.msra.mxu0 0.0
      %249 = vmatprep.subr.mxu0 0.0
      %250 = vmatpush1.msra.mxu0 0.0
      %251 = vmatprep.subr.mxu0 0.0
      %252 = vmatpush1.msra.mxu0 0.0
      %253 = vmatprep.subr.mxu0 0.0
      %254 = vmatpush1.msra.mxu0 0.0
      %255 = vmatprep.subr.mxu0 0.0
      %256 = vmatpush1.msra.mxu0 0.0
      %257 = vmatprep.subr.mxu0 0.0
      %258 = vmatpush1.msra.mxu0 0.0
      %259 = vmatprep.subr.mxu0 0.0
      %260 = vmatpush1.msra.mxu0 0.0
      %261 = vmatprep.subr.mxu0 0.0
      %262 = vmatpush1.msra.mxu0 0.0
      %263 = vmatprep.subr.mxu0 0.0
      %264 = vmatpush1.msra.mxu0 0.0
      %265 = vmatprep.subr.mxu0 0.0
      %266 = vmatpush1.msra.mxu0 0.0
      %267 = vmatprep.subr.mxu0 0.0
      %268 = vmatpush1.msra.mxu0 0.0
      %269 = vmatprep.subr.mxu0 0.0
      %270 = vmatpush1.msra.mxu0 0.0
      %271 = vmatprep.subr.mxu0 0.0
      %272 = vmatpush1.msra.mxu0 0.0
      %273 = vmatprep.subr.mxu0 0.0
      %274 = vmatpush1.msra.mxu0 0.0
      %275 = vmatprep.subr.mxu0 0.0
      %276 = vmatpush1.msra.mxu0 0.0
      %277 = vmatprep.subr.mxu0 0.0
      %278 = vmatpush1.msra.mxu0 0.0
      %279 = vmatprep.subr.mxu0 0.0
      %280 = vmatpush1.msra.mxu0 0.0
      %281 = vmatprep.subr.mxu0 0.0
      %282 = vmatpush1.msra.mxu0 0.0
      %283 = vmatprep.subr.mxu0 0.0
      %284 = vmatpush1.msra.mxu0 0.0
      %285 = vmatprep.subr.mxu0 0.0
      %286 = vmatpush1.msra.mxu0 0.0
      %287 = vmatprep.subr.mxu0 0.0
      %288 = vmatpush1.msra.mxu0 0.0
      %289 = vmatprep.mubr.f32.mxu0 0.0
      %290 = vmatmul.mubr.f32.gmra.mrb[0].mxu0 %v223
      %v291 = vpop.f32.mrb[0].mxu0
      %v292 = vadd.f32 0.0, %v291
      %v293 = vpop.f32.mrb[0].mxu0
      %294 = vdwg.mxu0
      %v295 = vrcp.pop %v292
      %v296 = vmul.f32 %v292, %v295
      %v297 = vsub.f32 2.0, %v296
      %v298 = vmul.f32 %v295, %v297
      %v299 = vld [vmem:[%s6] sm:$0x3]
      %vm300 = vcmask 15360
      %v302 = vsel %vm300, %v298, 0
      %vm304 = vcmask 1041408
      %v306 = vsel %vm304, %v299, 0
      %308 = vmatprep.subr.mxu0 0.0
      %309 = vmatpush1.msra.mxu0 %v306
      %310 = vmatprep.subr.mxu0 0.0
      %311 = vmatpush1.msra.mxu0 0.0
      %312 = vmatprep.subr.mxu0 0.0
      %313 = vmatpush1.msra.mxu0 0.0
      %314 = vmatprep.subr.mxu0 0.0
      %315 = vmatpush1.msra.mxu0 0.0
      %316 = vmatprep.subr.mxu0 0.0
      %317 = vmatpush1.msra.mxu0 0.0
      %318 = vmatprep.subr.mxu0 0.0
      %319 = vmatpush1.msra.mxu0 0.0
      %320 = vmatprep.subr.mxu0 0.0
      %321 = vmatpush1.msra.mxu0 0.0
      %322 = vmatprep.subr.mxu0 0.0
      %323 = vmatpush1.msra.mxu0 0.0
      %324 = vmatprep.subr.mxu0 0.0
      %325 = vmatpush1.msra.mxu0 0.0
      %326 = vmatprep.subr.mxu0 0.0
      %327 = vmatpush1.msra.mxu0 0.0
      %328 = vmatprep.subr.mxu0 0.0
      %329 = vmatpush1.msra.mxu0 0.0
      %330 = vmatprep.subr.mxu0 0.0
      %331 = vmatpush1.msra.mxu0 0.0
      %332 = vmatprep.subr.mxu0 0.0
      %333 = vmatpush1.msra.mxu0 0.0
      %334 = vmatprep.subr.mxu0 0.0
      %335 = vmatpush1.msra.mxu0 0.0
      %336 = vmatprep.subr.mxu0 0.0
      %337 = vmatpush1.msra.mxu0 0.0
      %338 = vmatprep.subr.mxu0 0.0
      %339 = vmatpush1.msra.mxu0 0.0
      %340 = vmatprep.subr.mxu0 0.0
      %341 = vmatpush1.msra.mxu0 0.0
      %342 = vmatprep.subr.mxu0 0.0
      %343 = vmatpush1.msra.mxu0 0.0
      %344 = vmatprep.subr.mxu0 0.0
      %345 = vmatpush1.msra.mxu0 0.0
      %346 = vmatprep.subr.mxu0 0.0
      %347 = vmatpush1.msra.mxu0 0.0
      %348 = vmatprep.subr.mxu0 0.0
      %349 = vmatpush1.msra.mxu0 0.0
      %350 = vmatprep.subr.mxu0 0.0
      %351 = vmatpush1.msra.mxu0 0.0
      %352 = vmatprep.subr.mxu0 0.0
      %353 = vmatpush1.msra.mxu0 0.0
      %354 = vmatprep.subr.mxu0 0.0
      %355 = vmatpush1.msra.mxu0 0.0
      %356 = vmatprep.subr.mxu0 0.0
      %357 = vmatpush1.msra.mxu0 0.0
      %358 = vmatprep.subr.mxu0 0.0
      %359 = vmatpush1.msra.mxu0 0.0
      %360 = vmatprep.subr.mxu0 0.0
      %361 = vmatpush1.msra.mxu0 0.0
      %362 = vmatprep.subr.mxu0 0.0
      %363 = vmatpush1.msra.mxu0 0.0
      %364 = vmatprep.subr.mxu0 0.0
      %365 = vmatpush1.msra.mxu0 0.0
      %366 = vmatprep.subr.mxu0 0.0
      %367 = vmatpush1.msra.mxu0 0.0
      %368 = vmatprep.subr.mxu0 0.0
      %369 = vmatpush1.msra.mxu0 0.0
      %370 = vmatprep.subr.mxu0 0.0
      %371 = vmatpush1.msra.mxu0 0.0
      %372 = vmatprep.mubr.f32.mxu0 0.0
      %373 = vmatmul.mubr.f32.gmra.mrb[0].mxu0 %v302
      %v374 = vpop.f32.mrb[0].mxu0
      %v375 = vadd.f32 0.0, %v374
      %v376 = vpop.f32.mrb[0].mxu0
      %377 = vdwg.mxu0
      %v378 = vmul.f32 %v219, %v375
      %379 = vst.msk [vmem:[#allocation3] sm:$0x1] %vm213, %v378
    $region37: #{tpu_custom_call.1} parent=1 // pred_fallthru
      _
    // Predicated region
    $region38: #{tpu_custom_call.1} parent=1 // pred_check
      _
    $region39: #{tpu_custom_call.1} parent=1 // pred_check_branch
      %381 = sbr.rel (0) target = $region41
    $region40: #{tpu_custom_call.1} parent=1 // pred_region
      %s383 = ssub.s32 16, 16
      %384 = vsyncadd [#allocation4], %s383
      %s386 = sshll.u32 [#allocation3], 4
      %s387 = int_to_ptr.vmem [resolvable:$true] %s386
      %389 = dma.vmem_to_hbm [thread:$0]  %s387, 16, %s7, [#allocation4]
    $region41: #{tpu_custom_call.1} parent=1 // pred_fallthru
      _
    // Predicated region
    $region42: #{tpu_custom_call.1} parent=1 // pred_check
      _
    $region43: #{tpu_custom_call.1} parent=1 // pred_check_branch
      %391 = sbr.rel (0) target = $region45
    $region44: #{tpu_custom_call.1} parent=1 // pred_region
      %392 = dma.done [#allocation4], 16
    $region45: #{tpu_custom_call.1} parent=1 // pred_fallthru
      _
    %393 = vsyncpa [#allocation4], 1

</llo_original>
